<compile_context>
chip_gen: v7x
topology: tpu7x:2x2x1
jax: 0.10.0
libtpu: 0.0.40
codegen_flags: <defaults>
</compile_context>

<pallas_src>
import math
from functools import partial

import jax
import jax.numpy as jnp
from jax.experimental import pallas as pl
from jax.experimental.pallas import tpu as pltpu


IGNORE_INDEX = 255
_CORE_SPLITS = 2    # row-range split for v7x's 2 TensorCores; harmless on 1-TC chips
_OUT_ROWS = 8       # (8, 128) lane-aligned partial-result tile per split
_OUT_COLS = 128


def _symmetric_loss_kernel(x_ref, gt_ref, out_ref, acc_s, acc_cnt, *, n_rows):
    c = pl.program_id(0)              # core-split index
    i = pl.program_id(1)              # row-block index within the split
    spc = pl.num_programs(1)          # row blocks per split

    @pl.when(i == 0)
    def _init():
        acc_s[...] = jnp.zeros_like(acc_s)
        acc_cnt[...] = jnp.zeros_like(acc_cnt)

    x = x_ref[...].astype(jnp.float32)          # (T, C)
    gt = gt_ref[...]                            # (T, 1) int32
    T, C = x.shape

    # Global row index of every sublane in this block (UNCLAMPED: blocks whose
    # index_map was clamped lie entirely past n_rows and therefore mask to zero).
    blk = c * spc + i
    row = blk * T + jax.lax.broadcasted_iota(jnp.int32, (T, 1), 0)
    valid = (row < n_rows) & (gt != IGNORE_INDEX)       # (T, 1) bool
    gt_clean = jnp.where(valid, gt, 0)                  # (T, 1)

    # log_softmax(x) row statistics -- the only full-tile exp pass.
    m = jnp.max(x, axis=1, keepdims=True)                           # (T, 1)
    xm = x - m                                                      # (T, C)
    lse = jnp.log(jnp.sum(jnp.exp(xm), axis=1, keepdims=True))      # (T, 1)
    sum_xm = jnp.sum(xm, axis=1, keepdims=True)                     # (T, 1)

    # (x - m)[gt] gather via compare + select + lane reduce (no one-hot tile kept).
    col = jax.lax.broadcasted_iota(jnp.int32, (T, C), 1)
    xm_gt = jnp.sum(jnp.where(col == gt_clean, xm, 0.0), axis=1, keepdims=True)

    logp_gt = xm_gt - lse                                           # (T, 1)
    p_gt = jnp.exp(logp_gt)                                         # (T, 1)

    # Closed-form softmax/log_softmax of one_hot (+1e-5 uniform shift cancels):
    #   q_hot = e/(e+C-1), q_other = 1/(e+C-1)
    #   log_q_other = -log(e+C-1), log_q_hot - log_q_other = 1
    denom = math.e + (C - 1)
    q_other = 1.0 / denom
    q_hot = math.e / denom
    log_q_other = -math.log(denom)

    # sum_c softmax(x)*log_softmax(one_hot)  = log_q_other + p_gt
    # sum_c softmax(one_hot)*log_softmax(x)  = q_other*(sum(x-m) - C*lse)
    #                                        + (q_hot - q_other)*logp_gt
    s_row = (log_q_other + p_gt
             + q_other * (sum_xm - C * lse)
             + (q_hot - q_other) * logp_gt)                         # (T, 1)

    # jnp.where (not multiply) so NaN/Inf in ignored / out-of-range rows can't leak.
    acc_s[...] += jnp.where(valid, s_row, 0.0)
    acc_cnt[...] += jnp.where(valid, 1.0, 0.0)

    @pl.when(i == spc - 1)
    def _finalize():
        total = jnp.sum(acc_s[...])
        count = jnp.sum(acc_cnt[...])
        rr = jax.lax.broadcasted_iota(jnp.int32, out_ref.shape, 0)
        cc = jax.lax.broadcasted_iota(jnp.int32, out_ref.shape, 1)
        # Partial results for this core split: [0,0] = sum, [0,1] = valid-row count.
        out_ref[...] = jnp.where((rr == 0) & (cc == 0), total,
                                 jnp.where((rr == 0) & (cc == 1), count, 0.0))


def symmetric_loss(x, gt, ignore_index=IGNORE_INDEX, target_block_bytes=4 << 20):
    """x: (N, C) float (f32 or bf16); gt: (N,) int labels (ignore_index rows skipped)."""
    assert ignore_index == IGNORE_INDEX, "kernel hardcodes ignore_index=255"
    N, C = x.shape
    gt2d = gt.astype(jnp.int32).reshape(N, 1)

    # Byte-based tiling: ~target_block_bytes per x block (HBM-roofline sized),
    # rounded to a multiple of 16 rows (legal sublane packing for f32 and bf16),
    # never (much) bigger than the row count itself.
    itemsize = jnp.dtype(x.dtype).itemsize
    sub = 16
    rows_for_bytes = max(sub, target_block_bytes // max(1, C * itemsize))
    n_rounded = ((N + sub - 1) // sub) * sub
    tile = int(min((rows_for_bytes // sub) * sub, n_rounded))
    tile = max(sub, tile)

    steps_total = (N + tile - 1) // tile
    splits = _CORE_SPLITS if steps_total >= _CORE_SPLITS else 1
    steps_per_split = (steps_total + splits - 1) // splits

    # Row-block index for grid point (c, i); clamped so the (at most splits-1)
    # overhang blocks re-read the last real block, whose rows the kernel masks out.
    def _blk(c, i):
        return jnp.minimum(c * steps_per_split + i, steps_total - 1)

    # VMEM budget: x double-buffered + gt + (tile, 1) accumulators + out tiles.
    x_block = tile * C * itemsize
    gt_block = tile * 4
    est = 2 * (x_block + gt_block) + 2 * tile * 4 + splits * _OUT_ROWS * _OUT_COLS * 4
    vmem_limit = int(min(max(2 * est, 32 << 20), 48 << 20))  # stay under v7x's 64 MiB

    out = pl.pallas_call(
        partial(_symmetric_loss_kernel, n_rows=N),
        out_shape=jax.ShapeDtypeStruct((splits * _OUT_ROWS, _OUT_COLS), jnp.float32),
        grid_spec=pltpu.PrefetchScalarGridSpec(
            num_scalar_prefetch=0,
            grid=(splits, steps_per_split),
            in_specs=[
                pl.BlockSpec((tile, C), lambda c, i: (_blk(c, i), 0)),
                pl.BlockSpec((tile, 1), lambda c, i: (_blk(c, i), 0)),
            ],
            out_specs=pl.BlockSpec((_OUT_ROWS, _OUT_COLS), lambda c, i: (c, 0)),
            scratch_shapes=[
                pltpu.VMEM((tile, 1), jnp.float32),   # running per-row sums
                pltpu.VMEM((tile, 1), jnp.float32),   # running valid-row counts
            ],
        ),
        compiler_params=pltpu.CompilerParams(
            # Core-split axis is independent (megacore-shardable on v7x);
            # the row-block axis carries the running reduction.
            dimension_semantics=("parallel", "arbitrary"),
            vmem_limit_bytes=vmem_limit,
        ),
    )(x, gt2d)

    total = jnp.sum(out[::_OUT_ROWS, 0])
    count_rows = jnp.sum(out[::_OUT_ROWS, 1])
    # Matches the PyTorch reference: NaN if every row is ignore_index.
    return -total / (count_rows * jnp.float32(C))


def _reference(x, gt, ignore_index=IGNORE_INDEX):
    """Pure-JAX reference mirroring the PyTorch forward exactly."""
    N, C = x.shape
    gt_ = jnp.where(gt != ignore_index, gt, 0)
    one_hot = jax.nn.one_hot(gt_, C, dtype=jnp.float32)
    xf = x.astype(jnp.float32)
    plogq = jax.nn.softmax(one_hot + 1e-5, axis=1) * jax.nn.log_softmax(xf, axis=1)
    qlogp = jax.nn.softmax(xf, axis=1) * jax.nn.log_softmax(one_hot + 1e-5, axis=1)
    valid = gt != ignore_index
    sel = (qlogp + plogq)[valid]
    return -1.0 * jnp.mean(sel)


if __name__ == "__main__":
    # TODO(synk): the original forward's print()/input() debugging side-effects are omitted.
    key = jax.random.PRNGKey(0)

    # Case 1: single-block path (N=16, C=32) with some ignored rows.
    kx, kg = jax.random.split(key)
    N, C = 16, 32
    x = jax.random.normal(kx, (N, C), dtype=jnp.float32)
    gt = jax.random.randint(kg, (N,), 0, C, dtype=jnp.int32)
    gt = gt.at[2].set(IGNORE_INDEX).at[5].set(IGNORE_INDEX)
    loss = jax.block_until_ready(symmetric_loss(x, gt))
    ref = jax.block_until_ready(_reference(x, gt))
    assert jnp.allclose(loss, ref, rtol=1e-5, atol=1e-5), (loss, ref)

    # Case 2: multi-block grid with a ragged tail, no host padding, and the
    # 2-way core split (N=40 rows, tiny target_block_bytes forces tile=16 ->
    # 3 real row blocks over a (2, 2) grid; the overhang block is clamped+masked).
    kx2, kg2 = jax.random.split(kg)
    N2, C2 = 40, 16
    x2 = jax.random.normal(kx2, (N2, C2), dtype=jnp.float32)
    gt2 = jax.random.randint(kg2, (N2,), 0, C2, dtype=jnp.int32)
    gt2 = gt2.at[0].set(IGNORE_INDEX).at[13].set(IGNORE_INDEX).at[39].set(IGNORE_INDEX)
    loss2 = jax.block_until_ready(symmetric_loss(x2, gt2, target_block_bytes=1024))
    ref2 = jax.block_until_ready(_reference(x2, gt2))
    assert jnp.allclose(loss2, ref2, rtol=1e-5, atol=1e-5), (loss2, ref2)

    print("KERNEL_OK")
</pallas_src>

<mosaic_0001>
module attributes {stable_mosaic.version = 11 : i64} {
  func.func @_symmetric_loss_kernel(%arg0: i32, %arg1: i32, %arg2: memref<16x32xf32, #tpu.memory_space<vmem>>, %arg3: memref<16x1xi32, #tpu.memory_space<vmem>>, %arg4: memref<8x128xf32, #tpu.memory_space<vmem>>, %arg5: memref<16x1xf32, #tpu.memory_space<vmem>>, %arg6: memref<16x1xf32, #tpu.memory_space<vmem>>) attributes {dimension_semantics = [#tpu.dimension_semantics<parallel>, #tpu.dimension_semantics<arbitrary>], iteration_bounds = array<i64: 1, 1>, scalar_prefetch = 0 : i64, scratch_operands = 2 : i64, tpu.core_type = #tpu.core_type<tc>, window_params = [{transform_indices = @transform_0, window_bounds = array<i64: 16, 32>}, {transform_indices = @transform_1, window_bounds = array<i64: 16, 1>}, {transform_indices = @transform_2, window_bounds = array<i64: 8, 128>}]} {
    %c0_i32 = arith.constant 0 : i32
    %0 = arith.cmpi eq, %arg1, %c0_i32 : i32
    %1 = arith.extui %0 : i1 to i32
    %c0_i32_0 = arith.constant 0 : i32
    %2 = arith.cmpi ne, %1, %c0_i32_0 : i32
    scf.if %2 {
      %cst_27 = arith.constant 0.000000e+00 : f32
      %62 = vector.broadcast %cst_27 : f32 to vector<16x1xf32>
      %c0_28 = arith.constant 0 : index
      %c0_29 = arith.constant 0 : index
      %63 = vector.load %arg5[%c0_28, %c0_29] : memref<16x1xf32, #tpu.memory_space<vmem>>, vector<16x1xf32>
      tpu.vector_store %arg5[%c0_28, %c0_29], %62 {strides = array<i32>} : memref<16x1xf32, #tpu.memory_space<vmem>>, vector<16x1xf32>,
      %cst_30 = arith.constant 0.000000e+00 : f32
      %64 = vector.broadcast %cst_30 : f32 to vector<16x1xf32>
      %c0_31 = arith.constant 0 : index
      %c0_32 = arith.constant 0 : index
      %65 = vector.load %arg6[%c0_31, %c0_32] : memref<16x1xf32, #tpu.memory_space<vmem>>, vector<16x1xf32>
      tpu.vector_store %arg6[%c0_31, %c0_32], %64 {strides = array<i32>} : memref<16x1xf32, #tpu.memory_space<vmem>>, vector<16x1xf32>,
    } else {
    }
    %c0 = arith.constant 0 : index
    %c0_1 = arith.constant 0 : index
    %3 = vector.load %arg2[%c0, %c0_1] : memref<16x32xf32, #tpu.memory_space<vmem>>, vector<16x32xf32>
    %c0_2 = arith.constant 0 : index
    %c0_3 = arith.constant 0 : index
    %4 = vector.load %arg3[%c0_2, %c0_3] : memref<16x1xi32, #tpu.memory_space<vmem>>, vector<16x1xi32>
    %c1_i32 = arith.constant 1 : i32
    %5 = arith.muli %arg0, %c1_i32 : i32
    %6 = arith.addi %5, %arg1 : i32
    %c16_i32 = arith.constant 16 : i32
    %7 = arith.muli %6, %c16_i32 : i32
    %8 = tpu.iota {dimensions = array<i32: 0>} : vector<16x1xi32>
    %9 = vector.broadcast %7 : i32 to vector<16x1xi32>
    %10 = arith.addi %9, %8 : vector<16x1xi32>
    %c16_i32_4 = arith.constant 16 : i32
    %11 = vector.broadcast %c16_i32_4 : i32 to vector<16x1xi32>
    %12 = arith.cmpi slt, %10, %11 : vector<16x1xi32>
    %c255_i32 = arith.constant 255 : i32
    %13 = vector.broadcast %c255_i32 : i32 to vector<16x1xi32>
    %14 = arith.cmpi ne, %4, %13 : vector<16x1xi32>
    %15 = arith.andi %12, %14 : vector<16x1xi1>
    %c0_i32_5 = arith.constant 0 : i32
    %16 = vector.broadcast %c0_i32_5 : i32 to vector<16x1xi32>
    %17 = arith.select %15, %4, %16 : vector<16x1xi1>, vector<16x1xi32>
    %cst = arith.constant dense<0xFF800000> : vector<16xf32>
    %18 = vector.multi_reduction <maximumf>, %3, %cst [1] : vector<16x32xf32> to vector<16xf32>
    %19 = vector.shape_cast %18 : vector<16xf32> to vector<16x1xf32>
    %20 = vector.broadcast %19 : vector<16x1xf32> to vector<16x32xf32>
    %21 = arith.subf %3, %20 : vector<16x32xf32>
    %22 = math.exp %21 : vector<16x32xf32>
    %cst_6 = arith.constant dense<0.000000e+00> : vector<16xf32>
    %23 = vector.multi_reduction <add>, %22, %cst_6 [1] : vector<16x32xf32> to vector<16xf32>
    %24 = vector.shape_cast %23 : vector<16xf32> to vector<16x1xf32>
    %25 = math.log %24 : vector<16x1xf32>
    %cst_7 = arith.constant dense<0.000000e+00> : vector<16xf32>
    %26 = vector.multi_reduction <add>, %21, %cst_7 [1] : vector<16x32xf32> to vector<16xf32>
    %27 = vector.shape_cast %26 : vector<16xf32> to vector<16x1xf32>
    %28 = tpu.iota {dimensions = array<i32: 1>} : vector<16x32xi32>
    %29 = vector.broadcast %17 : vector<16x1xi32> to vector<16x32xi32>
    %30 = arith.cmpi eq, %28, %29 : vector<16x32xi32>
    %cst_8 = arith.constant 0.000000e+00 : f32
    %31 = vector.broadcast %cst_8 : f32 to vector<16x32xf32>
    %32 = arith.select %30, %21, %31 : vector<16x32xi1>, vector<16x32xf32>
    %cst_9 = arith.constant dense<0.000000e+00> : vector<16xf32>
    %33 = vector.multi_reduction <add>, %32, %cst_9 [1] : vector<16x32xf32> to vector<16xf32>
    %34 = vector.shape_cast %33 : vector<16xf32> to vector<16x1xf32>
    %35 = arith.subf %34, %25 : vector<16x1xf32>
    %36 = math.exp %35 : vector<16x1xf32>
    %cst_10 = arith.constant -3.51804018 : f32
    %37 = vector.broadcast %cst_10 : f32 to vector<16x1xf32>
    %38 = arith.addf %37, %36 : vector<16x1xf32>
    %cst_11 = arith.constant 3.200000e+01 : f32
    %39 = vector.broadcast %cst_11 : f32 to vector<16x1xf32>
    %40 = arith.mulf %39, %25 : vector<16x1xf32>
    %41 = arith.subf %27, %40 : vector<16x1xf32>
    %cst_12 = arith.constant 0.0296575017 : f32
    %42 = vector.broadcast %cst_12 : f32 to vector<16x1xf32>
    %43 = arith.mulf %42, %41 : vector<16x1xf32>
    %44 = arith.addf %38, %43 : vector<16x1xf32>
    %cst_13 = arith.constant 0.0509599447 : f32
    %45 = vector.broadcast %cst_13 : f32 to vector<16x1xf32>
    %46 = arith.mulf %45, %35 : vector<16x1xf32>
    %47 = arith.addf %44, %46 : vector<16x1xf32>
    %c0_14 = arith.constant 0 : index
    %c0_15 = arith.constant 0 : index
    %48 = vector.load %arg5[%c0_14, %c0_15] : memref<16x1xf32, #tpu.memory_space<vmem>>, vector<16x1xf32>
    %cst_16 = arith.constant 0.000000e+00 : f32
    %49 = vector.broadcast %cst_16 : f32 to vector<16x1xf32>
    %50 = arith.select %15, %47, %49 : vector<16x1xi1>, vector<16x1xf32>
    %51 = arith.addf %48, %50 : vector<16x1xf32>
    %c0_17 = arith.constant 0 : index
    %c0_18 = arith.constant 0 : index
    %52 = vector.load %arg5[%c0_17, %c0_18] : memref<16x1xf32, #tpu.memory_space<vmem>>, vector<16x1xf32>
    tpu.vector_store %arg5[%c0_17, %c0_18], %51 {strides = array<i32>} : memref<16x1xf32, #tpu.memory_space<vmem>>, vector<16x1xf32>,
    %c0_19 = arith.constant 0 : index
    %c0_20 = arith.constant 0 : index
    %53 = vector.load %arg6[%c0_19, %c0_20] : memref<16x1xf32, #tpu.memory_space<vmem>>, vector<16x1xf32>
    %cst_21 = arith.constant 1.000000e+00 : f32
    %cst_22 = arith.constant 0.000000e+00 : f32
    %54 = vector.broadcast %cst_21 : f32 to vector<16x1xf32>
    %55 = vector.broadcast %cst_22 : f32 to vector<16x1xf32>
    %56 = arith.select %15, %54, %55 : vector<16x1xi1>, vector<16x1xf32>
    %57 = arith.addf %53, %56 : vector<16x1xf32>
    %c0_23 = arith.constant 0 : index
    %c0_24 = arith.constant 0 : index
    %58 = vector.load %arg6[%c0_23, %c0_24] : memref<16x1xf32, #tpu.memory_space<vmem>>, vector<16x1xf32>
    tpu.vector_store %arg6[%c0_23, %c0_24], %57 {strides = array<i32>} : memref<16x1xf32, #tpu.memory_space<vmem>>, vector<16x1xf32>,
    %c0_i32_25 = arith.constant 0 : i32
    %59 = arith.cmpi eq, %arg1, %c0_i32_25 : i32
    %60 = arith.extui %59 : i1 to i32
    %c0_i32_26 = arith.constant 0 : i32
    %61 = arith.cmpi ne, %60, %c0_i32_26 : i32
    scf.if %61 {
      %c0_27 = arith.constant 0 : index
      %c0_28 = arith.constant 0 : index
      %62 = vector.load %arg5[%c0_27, %c0_28] : memref<16x1xf32, #tpu.memory_space<vmem>>, vector<16x1xf32>
      %63 = vector.shape_cast %62 : vector<16x1xf32> to vector<1x16x1xf32>
      %cst_29 = arith.constant dense<0.000000e+00> : vector<1xf32>
      %64 = vector.multi_reduction <add>, %63, %cst_29 [1, 2] : vector<1x16x1xf32> to vector<1xf32>
      %65 = vector.shape_cast %64 : vector<1xf32> to vector<1x1x1xf32>
      %66 = vector.extract %65[0, 0, 0] : f32 from vector<1x1x1xf32>
      %c0_30 = arith.constant 0 : index
      %c0_31 = arith.constant 0 : index
      %67 = vector.load %arg6[%c0_30, %c0_31] : memref<16x1xf32, #tpu.memory_space<vmem>>, vector<16x1xf32>
      %68 = vector.shape_cast %67 : vector<16x1xf32> to vector<1x16x1xf32>
      %cst_32 = arith.constant dense<0.000000e+00> : vector<1xf32>
      %69 = vector.multi_reduction <add>, %68, %cst_32 [1, 2] : vector<1x16x1xf32> to vector<1xf32>
      %70 = vector.shape_cast %69 : vector<1xf32> to vector<1x1x1xf32>
      %71 = vector.extract %70[0, 0, 0] : f32 from vector<1x1x1xf32>
      %72 = tpu.iota {dimensions = array<i32: 0>} : vector<8x128xi32>
      %73 = tpu.iota {dimensions = array<i32: 1>} : vector<8x128xi32>
      %c0_i32_33 = arith.constant 0 : i32
      %74 = vector.broadcast %c0_i32_33 : i32 to vector<8x128xi32>
      %75 = arith.cmpi eq, %72, %74 : vector<8x128xi32>
      %c0_i32_34 = arith.constant 0 : i32
      %76 = vector.broadcast %c0_i32_34 : i32 to vector<8x128xi32>
      %77 = arith.cmpi eq, %73, %76 : vector<8x128xi32>
      %78 = arith.andi %75, %77 : vector<8x128xi1>
      %c0_i32_35 = arith.constant 0 : i32
      %79 = vector.broadcast %c0_i32_35 : i32 to vector<8x128xi32>
      %80 = arith.cmpi eq, %72, %79 : vector<8x128xi32>
      %c1_i32_36 = arith.constant 1 : i32
      %81 = vector.broadcast %c1_i32_36 : i32 to vector<8x128xi32>
      %82 = arith.cmpi eq, %73, %81 : vector<8x128xi32>
      %83 = arith.andi %80, %82 : vector<8x128xi1>
      %cst_37 = arith.constant 0.000000e+00 : f32
      %84 = vector.broadcast %71 : f32 to vector<8x128xf32>
      %85 = vector.broadcast %cst_37 : f32 to vector<8x128xf32>
      %86 = arith.select %83, %84, %85 : vector<8x128xi1>, vector<8x128xf32>
      %87 = vector.broadcast %66 : f32 to vector<8x128xf32>
      %88 = arith.select %78, %87, %86 : vector<8x128xi1>, vector<8x128xf32>
      %c0_38 = arith.constant 0 : index
      %c0_39 = arith.constant 0 : index
      %89 = vector.load %arg4[%c0_38, %c0_39] : memref<8x128xf32, #tpu.memory_space<vmem>>, vector<8x128xf32>
      tpu.vector_store %arg4[%c0_38, %c0_39], %88 {strides = array<i32>} : memref<8x128xf32, #tpu.memory_space<vmem>>, vector<8x128xf32>,
    } else {
    }
    return
  }
  func.func @transform_0(%arg0: i32, %arg1: i32) -> (i32, i32) {
    %c1_i32 = arith.constant 1 : i32
    %0 = arith.muli %arg0, %c1_i32 : i32
    %1 = arith.addi %0, %arg1 : i32
    %c0_i32 = arith.constant 0 : i32
    %2 = arith.minsi %1, %c0_i32 : i32
    %c0_i32_0 = arith.constant 0 : i32
    %c0_i32_1 = arith.constant 0 : i32
    return %2, %c0_i32_0 : i32, i32
  }
  func.func @transform_1(%arg0: i32, %arg1: i32) -> (i32, i32) {
    %c1_i32 = arith.constant 1 : i32
    %0 = arith.muli %arg0, %c1_i32 : i32
    %1 = arith.addi %0, %arg1 : i32
    %c0_i32 = arith.constant 0 : i32
    %2 = arith.minsi %1, %c0_i32 : i32
    %c0_i32_0 = arith.constant 0 : i32
    %c0_i32_1 = arith.constant 0 : i32
    return %2, %c0_i32_0 : i32, i32
  }
  func.func @transform_2(%arg0: i32, %arg1: i32) -> (i32, i32) {
    %c0_i32 = arith.constant 0 : i32
    %c0_i32_0 = arith.constant 0 : i32
    return %arg0, %c0_i32 : i32, i32
  }
}

</mosaic_0001>

<llo_original>
// kernel: tpu_custom_call.1
$region0: #{tpu_custom_call.1}
  #allocation0 [shape = 'u32[]', space=smem, size = 0x4, offset = 0x4, fixed_abs, tag = 'smem constant byte address 0x4 - core index']
  #allocation1 [shape = 'u32[144,128]{1,0:T(1,128)}', space=vmem, size = 0x12000, scoped, tag = 'internal scratch']
  #allocation2 [shape = 'f32[16,1]{1,0:T(8,128)}', space=vmem, size = 0x2000, scoped, tag = 'scratch operand']
  #allocation3 [shape = 'f32[16,1]{1,0:T(8,128)}', space=vmem, size = 0x2000, scoped, tag = 'scratch operand']
  %s0 = inlined_call_operand.vmem [shape: f32[16,32], index: 0, kind: input, shape index: {}]
  %s1 = inlined_call_operand.vmem [shape: s32[16,1], index: 1, kind: input, shape index: {}]
  %s2 = inlined_call_operand.hbm [shape: f32[8,128], index: 2, kind: output, shape index: {}]
  %s3 = sld [smem:[#allocation0]]
  $region26: #{tpu_custom_call.1} parent=0
    _
  %s5 = ssub.s32 1, %s3
  %s6 = scalar_select 0, %s5, %s3
  $region1: #{tpu_custom_call.1} parent=0
    #allocation4 [shape = 'u8[4096]{0}', space=vmem, size = 0x1000, scoped, tag = 'output window, operand 0, single buffered']
    #allocation5 [shape = 's32[1]{0}', space=sflag, size = 0x4, scoped, tag = 'scoped memory for tpu_custom_call.1']
    %7 = vsyncpa [#allocation5], 0
    // Predicated region
    $region2: #{tpu_custom_call.1} parent=1 // pred_check
      _
    $region3: #{tpu_custom_call.1} parent=1 // pred_check_branch
      %9 = sbr.rel (0) target = $region5
    $region4: #{tpu_custom_call.1} parent=1 // pred_region
      %s10 = sadd.s32 0, 0
      %p11 = scmp.lt.s32.totalorder %s10, 0
      %s12 = scalar_select %p11, %s10, 0
      %s13 = smul.u32 2, %s12
      %p14 = scmp.lt.s32.totalorder %s13, 1
      %s15 = scalar_select %p14, %s13, 1
      %s16 = smul.addr %s15, 8
      %s17 = scalar_lea.vmem %s0, %s16
      %s18 = sadd.s32 0, 0
      %p19 = scmp.lt.s32.totalorder %s18, 0
      %s20 = scalar_select %p19, %s18, 0
      %s21 = smul.u32 2, %s20
    $region5: #{tpu_custom_call.1} parent=1 // pred_fallthru
      _
    // Predicated region
    $region6: #{tpu_custom_call.1} parent=1 // pred_check
      _
    $region7: #{tpu_custom_call.1} parent=1 // pred_check_branch
      %23 = sbr.rel (0) target = $region9
    $region8: #{tpu_custom_call.1} parent=1 // pred_region
      %s24 = sadd.s32 0, 0
      %p25 = scmp.lt.s32.totalorder %s24, 0
      %s26 = scalar_select %p25, %s24, 0
      %s27 = smul.u32 2, %s26
      %p28 = scmp.lt.s32.totalorder %s27, 1
      %s29 = scalar_select %p28, %s27, 1
      %s30 = smul.addr %s29, 8
      %s31 = scalar_lea.vmem %s1, %s30
      %s32 = sadd.s32 0, 0
      %p33 = scmp.lt.s32.totalorder %s32, 0
      %s34 = scalar_select %p33, %s32, 0
      %s35 = smul.u32 2, %s34
    $region9: #{tpu_custom_call.1} parent=1 // pred_fallthru
      _
    %s36 = sadd.s32 0, 0
    %p37 = scmp.lt.s32.totalorder %s36, 0
    %s38 = scalar_select %p37, %s36, 0
    %s39 = smul.u32 2, %s38
    %p40 = scmp.lt.s32.totalorder %s39, 1
    %s41 = scalar_select %p40, %s39, 1
    %s42 = smul.addr %s41, 8
    %s43 = scalar_lea.vmem %s0, %s42
    %s44 = sadd.s32 0, 0
    %p45 = scmp.lt.s32.totalorder %s44, 0
    %s46 = scalar_select %p45, %s44, 0
    %s47 = smul.u32 2, %s46
    %p48 = scmp.lt.s32.totalorder %s47, 1
    %s49 = scalar_select %p48, %s47, 1
    %s50 = smul.addr %s49, 8
    %s51 = scalar_lea.vmem %s1, %s50
    %s52 = sadd.s32 0, 0
    %p53 = scmp.lt.s32.totalorder %s52, 0
    %s54 = scalar_select %p53, %s52, 0
    %s55 = smul.u32 2, %s54
    %p56 = scmp.lt.s32.totalorder %s55, 1
    %s57 = scalar_select %p56, %s55, 1
    %s58 = smul.addr %s57, 8
    %s59 = scalar_lea.vmem %s0, %s58
    %s60 = sadd.s32 0, 0
    %p61 = scmp.lt.s32.totalorder %s60, 0
    %s62 = scalar_select %p61, %s60, 0
    %s63 = smul.u32 2, %s62
    %s64 = sadd.s32 0, 0
    %p65 = scmp.lt.s32.totalorder %s64, 0
    %s66 = scalar_select %p65, %s64, 0
    %s67 = smul.u32 2, %s66
    %p68 = scmp.lt.s32.totalorder %s67, 1
    %s69 = scalar_select %p68, %s67, 1
    %s70 = smul.addr %s69, 8
    %s71 = scalar_lea.vmem %s1, %s70
    %s72 = sadd.s32 0, 0
    %p73 = scmp.lt.s32.totalorder %s72, 0
    %s74 = scalar_select %p73, %s72, 0
    %s75 = smul.u32 2, %s74
    %p76 = scmp.eq.s32.totalorder 0, 0
    // Predicated region
    $region10: #{tpu_custom_call.1} parent=1 // pred_check
      %p77 = pneg %p76
    $region11: #{tpu_custom_call.1} parent=1 // pred_check_branch
      %79 = sbr.rel (%p77) target = $region13
    $region12: #{tpu_custom_call.1} parent=1 // pred_region
      %vm80 = vcmask 7168
      %81 = vst.msk [vmem:[#allocation2] sm:$0xff] %vm80, 0.0
      %82 = vst.msk [vmem:[#allocation2 + $0x8] sm:$0xff] %vm80, 0.0
      %83 = vst.msk [vmem:[#allocation3] sm:$0xff] %vm80, 0.0
      %84 = vst.msk [vmem:[#allocation3 + $0x8] sm:$0xff] %vm80, 0.0
    $region13: #{tpu_custom_call.1} parent=1 // pred_fallthru
      _
    %v85 = vld [vmem:[%s59] sm:$0xff]
    %v86 = vld [vmem:[%s59 + $0x8] sm:$0xff]
    %v87 = vld [vmem:[%s71] sm:$0xff]
    %v88 = vld [vmem:[%s71 + $0x8] sm:$0xff]
    %s89 = sadd.s32 0, 0
    %s90 = smul.u32 %s89, 16
    %v91 = vlaneseq
    %v92 = vshrl.u32 %v91, 7
    %v93 = vadd.s32 %v92, 8
    %v94 = vstv %s90
    %v95 = vadd.s32 %v94, %v92
    %v96 = vadd.s32 %v94, %v93
    %vm97 = vcmp.lt.s32.totalorder %v95, 16
    %vm98 = vcmp.lt.s32.totalorder %v96, 16
    %vm99 = vcmp.ne.s32.totalorder %v87, 255
    %vm100 = vcmp.ne.s32.totalorder %v88, 255
    %vm101 = vmand %vm97, %vm99
    %vm102 = vmand %vm98, %vm100
    %v103 = vsel %vm101, %v87, 0
    %v104 = vsel %vm102, %v88, 0
    %vm105 = vcmask 261120
    %v106 = vsel %vm105, %v85, -inf
    %107 = vmax.xlane.f32.xlu0 %v106
    %v108 = vpop.xlane.xlu0 %107
    %v109 = vsel %vm105, %v86, -inf
    %110 = vmax.xlane.f32.xlu0 %v109
    %v111 = vpop.xlane.xlu0 %110
    %v112 = vsub.f32 %v85, %v108
    %v113 = vsub.f32 %v86, %v111
    %v114 = vmul.f32 %v112, 1.442695
    %v115 = vpow.pop %v114
    %v116 = vmul.f32 %v113, 1.442695
    %v117 = vpow.pop %v116
    %v118 = vsel %vm105, %v115, 0.0
    %119 = vadd.xlane.f32.xlu0 %v118
    %v120 = vpop.xlane.xlu0 %119
    %v121 = vsel %vm105, %v117, 0.0
    %122 = vadd.xlane.f32.xlu0 %v121
    %v123 = vpop.xlane.xlu0 %122
    %v124 = vlog2.pop %v120
    %v125 = vmul.f32 %v124, 0.6931472
    %v126 = vlog2.pop %v123
    %v127 = vmul.f32 %v126, 0.6931472
    %v128 = vsel %vm105, %v112, 0.0
    %129 = vadd.xlane.f32.xlu0 %v128
    %v130 = vpop.xlane.xlu0 %129
    %v131 = vsel %vm105, %v113, 0.0
    %132 = vadd.xlane.f32.xlu0 %v131
    %v133 = vpop.xlane.xlu0 %132
    %v134 = vlaneseq
    %v135 = vand.u32 %v134, 127
    %136 = vset.pattern.permute.xlu0 0
    %137 = vperm.xlu0 %136, %v103
    %v138 = vpop.permute.xlu0 %137
    %139 = vset.pattern.permute.xlu0 0
    %140 = vperm.xlu0 %139, %v104
    %v141 = vpop.permute.xlu0 %140
    %vm142 = vcmp.eq.s32.totalorder %v135, %v138
    %vm143 = vcmp.eq.s32.totalorder %v135, %v141
    %v144 = vsel %vm142, %v112, 0.0
    %v145 = vsel %vm143, %v113, 0.0
    %v146 = vsel %vm105, %v144, 0.0
    %147 = vadd.xlane.f32.xlu0 %v146
    %v148 = vpop.xlane.xlu0 %147
    %v149 = vsel %vm105, %v145, 0.0
    %150 = vadd.xlane.f32.xlu0 %v149
    %v151 = vpop.xlane.xlu0 %150
    %v152 = vsub.f32 %v148, %v125
    %v153 = vsub.f32 %v151, %v127
    %v154 = vmul.f32 %v152, 1.442695
    %v155 = vpow.pop %v154
    %v156 = vmul.f32 %v153, 1.442695
    %v157 = vpow.pop %v156
    %v158 = vadd.f32 %v155, -3.5180402
    %v159 = vadd.f32 %v157, -3.5180402
    %v160 = vmul.f32 %v125, 32.0
    %v161 = vmul.f32 %v127, 32.0
    %v162 = vsub.f32 %v130, %v160
    %v163 = vsub.f32 %v133, %v161
    %v164 = vmul.f32 %v162, 0.029657502
    %v165 = vmul.f32 %v163, 0.029657502
    %v166 = vadd.f32 %v158, %v164
    %v167 = vadd.f32 %v159, %v165
    %v168 = vmul.f32 %v152, 0.050959945
    %v169 = vmul.f32 %v153, 0.050959945
    %v170 = vadd.f32 %v166, %v168
    %v171 = vadd.f32 %v167, %v169
    %v172 = vld [vmem:[#allocation2] sm:$0xff]
    %v173 = vld [vmem:[#allocation2 + $0x8] sm:$0xff]
    %v174 = vsel %vm101, %v170, 0.0
    %v175 = vsel %vm102, %v171, 0.0
    %v176 = vadd.f32 %v172, %v174
    %v177 = vadd.f32 %v173, %v175
    %vm178 = vcmask 7168
    %179 = vst.msk [vmem:[#allocation2] sm:$0xff] %vm178, %v176
    %180 = vst.msk [vmem:[#allocation2 + $0x8] sm:$0xff] %vm178, %v177
    %v181 = vld [vmem:[#allocation3] sm:$0xff]
    %v182 = vld [vmem:[#allocation3 + $0x8] sm:$0xff]
    %v183 = vsel %vm101, 1.0, 0.0
    %v184 = vsel %vm102, 1.0, 0.0
    %v185 = vadd.f32 %v181, %v183
    %v186 = vadd.f32 %v182, %v184
    %187 = vst.msk [vmem:[#allocation3] sm:$0xff] %vm178, %v185
    %188 = vst.msk [vmem:[#allocation3 + $0x8] sm:$0xff] %vm178, %v186
    // Predicated region
    $region14: #{tpu_custom_call.1} parent=1 // pred_check
      %p189 = pneg %p76
    $region15: #{tpu_custom_call.1} parent=1 // pred_check_branch
      %191 = sbr.rel (%p189) target = $region17
    $region16: #{tpu_custom_call.1} parent=1 // pred_region
      %v192 = vld [vmem:[#allocation2] sm:$0xff]
      %v193 = vld [vmem:[#allocation2 + $0x8] sm:$0xff]
      %v194 = vsel %vm178, %v192, 0.0
      %v195 = vsel %vm178, %v193, 0.0
      %v196 = vadd.f32 %v194, %v195
      %197 = vadd.xlane.f32.xlu0 %v196
      %v198 = vpop.xlane.xlu0 %197
      %v199 = vrot.slane %v198, 4
      %v200 = vadd.f32 %v198, %v199
      %v201 = vrot.slane %v200, 2
      %v202 = vadd.f32 %v200, %v201
      %v203 = vrot.slane %v202, 1
      %v204 = vadd.f32 %v202, %v203
      %s205 = vtos %v204
      %v206 = vld [vmem:[#allocation3] sm:$0xff]
      %v207 = vld [vmem:[#allocation3 + $0x8] sm:$0xff]
      %v208 = vsel %vm178, %v206, 0.0
      %v209 = vsel %vm178, %v207, 0.0
      %v210 = vadd.f32 %v208, %v209
      %211 = vadd.xlane.f32.xlu0 %v210
      %v212 = vpop.xlane.xlu0 %211
      %v213 = vrot.slane %v212, 4
      %v214 = vadd.f32 %v212, %v213
      %v215 = vrot.slane %v214, 2
      %v216 = vadd.f32 %v214, %v215
      %v217 = vrot.slane %v216, 1
      %v218 = vadd.f32 %v216, %v217
      %s219 = vtos %v218
      %vm220 = vcmp.eq.s32.totalorder %v92, 0
      %vm221 = vcmp.eq.s32.totalorder %v135, 0
      %vm222 = vmand %vm220, %vm221
      %vm223 = vcmp.eq.s32.totalorder %v135, 1
      %vm224 = vmand %vm220, %vm223
      %v225 = vstv %s219
      %v226 = vsel %vm224, %v225, 0.0
      %v227 = vstv %s205
      %v228 = vsel %vm222, %v227, %v226
      %229 = vst [vmem:[#allocation4] sm:$0xff] %v228
    $region17: #{tpu_custom_call.1} parent=1 // pred_fallthru
      _
    // Predicated region
    $region18: #{tpu_custom_call.1} parent=1 // pred_check
      _
    $region19: #{tpu_custom_call.1} parent=1 // pred_check_branch
      %231 = sbr.rel (0) target = $region21
    $region20: #{tpu_custom_call.1} parent=1 // pred_region
      %s233 = ssub.s32 128, 128
      %234 = vsyncadd [#allocation5], %s233
      %s236 = sshll.u32 [#allocation4], 4
      %s237 = int_to_ptr.vmem [resolvable:$true] %s236
      %239 = dma.vmem_to_hbm [thread:$0]  %s237, 128, %s2, [#allocation5]
    $region21: #{tpu_custom_call.1} parent=1 // pred_fallthru
      _
    // Predicated region
    $region22: #{tpu_custom_call.1} parent=1 // pred_check
      _
    $region23: #{tpu_custom_call.1} parent=1 // pred_check_branch
      %241 = sbr.rel (0) target = $region25
    $region24: #{tpu_custom_call.1} parent=1 // pred_region
      %242 = dma.done [#allocation5], 128
    $region25: #{tpu_custom_call.1} parent=1 // pred_fallthru
      _
    %243 = vsyncpa [#allocation5], 1

</llo_original>
